<compile_context>
chip_gen: v7x
topology: tpu7x:2x2x1
jax: 0.10.0
libtpu: 0.0.40
codegen_flags: <defaults>
</compile_context>

<pallas_src>
import functools
import math

import jax
import jax.numpy as jnp
import numpy as np
from jax.experimental import pallas as pl
from jax.experimental.pallas import tpu as pltpu

_INV_SQRT2 = 1.0 / math.sqrt(2.0)

# ~12 MiB of live blocks (inputs + outputs, double-buffered): comfortably under
# the scoped-VMEM default on v5e/v6e/v7x, so no vmem_limit override needed.
_VMEM_BUDGET = 12 << 20


# ----------------------------------------------------------------------------
# Kernels
# ----------------------------------------------------------------------------
def _haar_pair_kernel(even_ref, odd_ref, c_ref, d_ref):
    """Pre-split inputs: c = (odd + even)/sqrt2, d = (odd - even)/sqrt2."""
    e = even_ref[...]
    o = odd_ref[...]
    c_ref[...] = (o + e) * _INV_SQRT2
    d_ref[...] = (o - e) * _INV_SQRT2


def _haar_split_kernel(x_ref, c_ref, d_ref):
    """In-kernel split: x block is (rows, 2, W); axis-1 index 0 = even, 1 = odd."""
    e = x_ref[:, 0:1, :]          # (rows, 1, W) — static sublane slice
    o = x_ref[:, 1:2, :]          # (rows, 1, W)
    c_ref[...] = (o + e) * _INV_SQRT2
    d_ref[...] = (o - e) * _INV_SQRT2


# ----------------------------------------------------------------------------
# Block sizing helpers
# ----------------------------------------------------------------------------
def _roundup(x, m):
    return ((x + m - 1) // m) * m


def _round_rows(rows, n_rows):
    rows = int(min(rows, n_rows))
    if rows >= 8:
        rows -= rows % 8          # sublane-aligned row blocks
    return max(1, rows)


def _pick_blocks_2d(n_rows, n_cols, itemsize):
    """Row/col block sizes for a lane-dense (rows, cols) layout."""
    lanes_full = _roundup(n_cols, 128)
    # live VMEM per (row, 128-lane) unit: 2 inputs + 2 outputs, double-buffered.
    per_unit = 4 * 128 * itemsize * 2
    per_row_full = (lanes_full // 128) * per_unit
    if 8 * per_row_full <= _VMEM_BUDGET:
        cb = n_cols                                           # full lane extent
        rb = _round_rows(_VMEM_BUDGET // per_row_full, n_rows)
    else:
        rb = min(8, n_rows)                                   # 8 or full (if <8)
        cb = max(128, (_VMEM_BUDGET // (rb * per_unit)) * 128)
        cb = min(cb, lanes_full)
    return rb, cb


def _pick_blocks_split(n_rows, w, itemsize):
    """Row/col block sizes for the (rows, 2, W) in-kernel-split layout."""
    lanes_full = _roundup(w, 128)
    # per leading row, per 128-lane unit: input (2->8 sublane-padded) plus two
    # outputs (1->8 padded), double-buffered by the pipeline.
    per_unit = (8 + 8 + 8) * 128 * itemsize * 2
    per_row_full = (lanes_full // 128) * per_unit
    if per_row_full <= _VMEM_BUDGET:
        wb = w
        rb = _round_rows(_VMEM_BUDGET // per_row_full, n_rows)
    else:
        rb = 1
        wb = max(128, (_VMEM_BUDGET // per_unit) * 128)
        wb = min(wb, lanes_full)
    return rb, wb


# ----------------------------------------------------------------------------
# pallas_call wrappers
# ----------------------------------------------------------------------------
def _haar_call_2d(x_even, x_odd):
    """Fused Haar step on pre-split 2-D (rows, lanes) even/odd arrays."""
    R, L = x_even.shape
    rb, cb = _pick_blocks_2d(R, L, x_even.dtype.itemsize)
    grid = (pl.cdiv(R, rb), pl.cdiv(L, cb))
    spec = pl.BlockSpec((rb, cb), lambda i, j: (i, j))
    return pl.pallas_call(
        _haar_pair_kernel,
        out_shape=(jax.ShapeDtypeStruct((R, L), x_even.dtype),
                   jax.ShapeDtypeStruct((R, L), x_even.dtype)),
        grid_spec=pltpu.PrefetchScalarGridSpec(
            num_scalar_prefetch=0,
            grid=grid,
            in_specs=[spec, spec],
            out_specs=[spec, spec],
        ),
        compiler_params=pltpu.CompilerParams(
            dimension_semantics=("parallel", "parallel")),
    )(x_even, x_odd)


def _haar_call_split(x3):
    """Fused Haar step with the even/odd split done inside the kernel.

    x3 has shape (M, 2, W): [:, 0, :] are even rows, [:, 1, :] odd rows.
    Outputs are (M, 1, W) so every block keeps full (sublane, lane) extents.
    """
    M, two, W = x3.shape
    assert two == 2
    rb, wb = _pick_blocks_split(M, W, x3.dtype.itemsize)
    grid = (pl.cdiv(M, rb), pl.cdiv(W, wb))
    in_spec = pl.BlockSpec((rb, 2, wb), lambda i, j: (i, 0, j))
    out_spec = pl.BlockSpec((rb, 1, wb), lambda i, j: (i, 0, j))
    return pl.pallas_call(
        _haar_split_kernel,
        out_shape=(jax.ShapeDtypeStruct((M, 1, W), x3.dtype),
                   jax.ShapeDtypeStruct((M, 1, W), x3.dtype)),
        grid_spec=pltpu.PrefetchScalarGridSpec(
            num_scalar_prefetch=0,
            grid=grid,
            in_specs=[in_spec],
            out_specs=[out_spec, out_spec],
        ),
        compiler_params=pltpu.CompilerParams(
            dimension_semantics=("parallel", "parallel")),
    )(x3)


# ----------------------------------------------------------------------------
# Public forward: WaveletHaar(horizontal).forward(x) for NCHW input
# ----------------------------------------------------------------------------
@functools.partial(jax.jit, static_argnames=("horizontal",))
def wavelet_haar(x, horizontal=True):
    """Returns (c, d): approximation and detail parts of the Haar wavelet."""
    n, c, h, w = x.shape
    if horizontal:
        if w % 2:
            raise ValueError("horizontal Haar split requires even W")
        wh = w // 2
        # Lane-interleaved split -> one XLA strided slice, then free reshapes to
        # a lane-dense (N*C, H*W/2) layout for the kernel.
        x_even = x[:, :, :, 0::2].reshape(n * c, h * wh)
        x_odd = x[:, :, :, 1::2].reshape(n * c, h * wh)
        cc, dd = _haar_call_2d(x_even, x_odd)
        return cc.reshape(n, c, h, wh), dd.reshape(n, c, h, wh)
    else:
        if h % 2:
            raise ValueError("vertical Haar split requires even H")
        hh = h // 2
        # Free reshape: (N, C, H, W) -> (N*C*H/2, 2, W); the size-2 axis selects
        # even/odd rows and the split happens inside the Pallas kernel.
        x3 = x.reshape(n * c * hh, 2, w)
        cc, dd = _haar_call_split(x3)
        return cc.reshape(n, c, hh, w), dd.reshape(n, c, hh, w)


# ----------------------------------------------------------------------------
# Pure-JAX reference (mirrors the PyTorch module)
# ----------------------------------------------------------------------------
def _ref_wavelet_haar(x, horizontal):
    if horizontal:
        xe, xo = x[:, :, :, 0::2], x[:, :, :, 1::2]
    else:
        xe, xo = x[:, :, 0::2, :], x[:, :, 1::2, :]
    norm = math.sqrt(2.0)
    return (xo + xe) / norm, (xo - xe) / norm


# ----------------------------------------------------------------------------
if __name__ == "__main__":
    key = jax.random.PRNGKey(0)
    N, C, H, W = 2, 4, 16, 16                 # NCHW, like the PyTorch module
    x = jax.random.normal(key, (N, C, H, W), jnp.float32)

    for horizontal in (True, False):
        c, d = jax.block_until_ready(wavelet_haar(x, horizontal=horizontal))
        if horizontal:
            assert c.shape == (N, C, H, W // 2) and d.shape == (N, C, H, W // 2)
        else:
            assert c.shape == (N, C, H // 2, W) and d.shape == (N, C, H // 2, W)
        c_ref, d_ref = _ref_wavelet_haar(x, horizontal)
        np.testing.assert_allclose(np.asarray(c), np.asarray(c_ref),
                                   atol=1e-5, rtol=1e-5)
        np.testing.assert_allclose(np.asarray(d), np.asarray(d_ref),
                                   atol=1e-5, rtol=1e-5)

    print("KERNEL_OK")
</pallas_src>

<mosaic_0001>
module attributes {stable_mosaic.version = 11 : i64} {
  func.func @_haar_pair_kernel(%arg0: i32, %arg1: i32, %arg2: memref<8x128xf32, #tpu.memory_space<vmem>>, %arg3: memref<8x128xf32, #tpu.memory_space<vmem>>, %arg4: memref<8x128xf32, #tpu.memory_space<vmem>>, %arg5: memref<8x128xf32, #tpu.memory_space<vmem>>) attributes {dimension_semantics = [#tpu.dimension_semantics<parallel>, #tpu.dimension_semantics<parallel>], iteration_bounds = array<i64: 1, 1>, scalar_prefetch = 0 : i64, scratch_operands = 0 : i64, tpu.core_type = #tpu.core_type<tc>, window_params = [{transform_indices = @transform_0, window_bounds = array<i64: 8, 128>}, {transform_indices = @transform_1, window_bounds = array<i64: 8, 128>}, {transform_indices = @transform_2, window_bounds = array<i64: 8, 128>}, {transform_indices = @transform_3, window_bounds = array<i64: 8, 128>}]} {
    %c0 = arith.constant 0 : index
    %c0_0 = arith.constant 0 : index
    %0 = vector.load %arg2[%c0, %c0_0] : memref<8x128xf32, #tpu.memory_space<vmem>>, vector<8x128xf32>
    %c0_1 = arith.constant 0 : index
    %c0_2 = arith.constant 0 : index
    %1 = vector.load %arg3[%c0_1, %c0_2] : memref<8x128xf32, #tpu.memory_space<vmem>>, vector<8x128xf32>
    %2 = arith.addf %1, %0 : vector<8x128xf32>
    %cst = arith.constant 0.707106769 : f32
    %3 = vector.broadcast %cst : f32 to vector<8x128xf32>
    %4 = arith.mulf %2, %3 : vector<8x128xf32>
    %c0_3 = arith.constant 0 : index
    %c0_4 = arith.constant 0 : index
    %5 = vector.load %arg4[%c0_3, %c0_4] : memref<8x128xf32, #tpu.memory_space<vmem>>, vector<8x128xf32>
    tpu.vector_store %arg4[%c0_3, %c0_4], %4 {strides = array<i32>} : memref<8x128xf32, #tpu.memory_space<vmem>>, vector<8x128xf32>,
    %6 = arith.subf %1, %0 : vector<8x128xf32>
    %cst_5 = arith.constant 0.707106769 : f32
    %7 = vector.broadcast %cst_5 : f32 to vector<8x128xf32>
    %8 = arith.mulf %6, %7 : vector<8x128xf32>
    %c0_6 = arith.constant 0 : index
    %c0_7 = arith.constant 0 : index
    %9 = vector.load %arg5[%c0_6, %c0_7] : memref<8x128xf32, #tpu.memory_space<vmem>>, vector<8x128xf32>
    tpu.vector_store %arg5[%c0_6, %c0_7], %8 {strides = array<i32>} : memref<8x128xf32, #tpu.memory_space<vmem>>, vector<8x128xf32>,
    return
  }
  func.func @transform_0(%arg0: i32, %arg1: i32) -> (i32, i32) {
    %c0_i32 = arith.constant 0 : i32
    return %arg0, %arg1 : i32, i32
  }
  func.func @transform_1(%arg0: i32, %arg1: i32) -> (i32, i32) {
    %c0_i32 = arith.constant 0 : i32
    return %arg0, %arg1 : i32, i32
  }
  func.func @transform_2(%arg0: i32, %arg1: i32) -> (i32, i32) {
    %c0_i32 = arith.constant 0 : i32
    return %arg0, %arg1 : i32, i32
  }
  func.func @transform_3(%arg0: i32, %arg1: i32) -> (i32, i32) {
    %c0_i32 = arith.constant 0 : i32
    return %arg0, %arg1 : i32, i32
  }
}

</mosaic_0001>

<llo_original>
// kernel: wavelet_haar.1
$region0: #{wavelet_haar.1}
  #allocation0 [shape = 'u32[]', space=smem, size = 0x4, offset = 0x4, fixed_abs, tag = 'smem constant byte address 0x4 - core index']
  #allocation1 [shape = 'u32[144,128]{1,0:T(1,128)}', space=vmem, size = 0x12000, scoped, tag = 'internal scratch']
  %s0 = inlined_call_operand.vmem [shape: f32[8,128], index: 0, kind: input, shape index: {}]
  %s1 = inlined_call_operand.vmem [shape: f32[8,128], index: 1, kind: input, shape index: {}]
  %s2 = inlined_call_operand.vmem [shape: f32[8,128], index: 2, kind: output, shape index: {0}]
  %s3 = inlined_call_operand.vmem [shape: f32[8,128], index: 3, kind: output, shape index: {1}]
  %4 = xla_tuple %s2, %s3
  %s5 = sld [smem:[#allocation0]]
  $region26: #{wavelet_haar.1} parent=0
    _
  %s7 = ssub.s32 1, %s5
  %s8 = scalar_select 0, %s7, %s5
  // Predicated region
  $region2: #{wavelet_haar.1} parent=0 // pred_check
    _
  $region3: #{wavelet_haar.1} parent=0 // pred_check_branch
    %10 = sbr.rel (0) target = $region5
  $region4: #{wavelet_haar.1} parent=0 // pred_region
    _
  $region5: #{wavelet_haar.1} parent=0 // pred_fallthru
    _
  // Predicated region
  $region6: #{wavelet_haar.1} parent=0 // pred_check
    _
  $region7: #{wavelet_haar.1} parent=0 // pred_check_branch
    %12 = sbr.rel (0) target = $region9
  $region8: #{wavelet_haar.1} parent=0 // pred_region
    _
  $region9: #{wavelet_haar.1} parent=0 // pred_fallthru
    _
  %v13 = vld [vmem:[%s0] sm:$0xff]
  %v14 = vld [vmem:[%s1] sm:$0xff]
  %v15 = vadd.f32 %v14, %v13
  %v16 = vmul.f32 %v15, 0.70710677
  %17 = vst [vmem:[%s2] sm:$0xff] %v16
  %v18 = vsub.f32 %v14, %v13
  %v19 = vmul.f32 %v18, 0.70710677
  %20 = vst [vmem:[%s3] sm:$0xff] %v19
  // Predicated region
  $region10: #{wavelet_haar.1} parent=0 // pred_check
    _
  $region11: #{wavelet_haar.1} parent=0 // pred_check_branch
    %22 = sbr.rel (0) target = $region13
  $region12: #{wavelet_haar.1} parent=0 // pred_region
    _
  $region13: #{wavelet_haar.1} parent=0 // pred_fallthru
    _
  // Predicated region
  $region14: #{wavelet_haar.1} parent=0 // pred_check
    _
  $region15: #{wavelet_haar.1} parent=0 // pred_check_branch
    %24 = sbr.rel (0) target = $region17
  $region16: #{wavelet_haar.1} parent=0 // pred_region
    _
  $region17: #{wavelet_haar.1} parent=0 // pred_fallthru
    _
  // Predicated region
  $region18: #{wavelet_haar.1} parent=0 // pred_check
    _
  $region19: #{wavelet_haar.1} parent=0 // pred_check_branch
    %26 = sbr.rel (0) target = $region21
  $region20: #{wavelet_haar.1} parent=0 // pred_region
    _
  $region21: #{wavelet_haar.1} parent=0 // pred_fallthru
    _
  // Predicated region
  $region22: #{wavelet_haar.1} parent=0 // pred_check
    _
  $region23: #{wavelet_haar.1} parent=0 // pred_check_branch
    %28 = sbr.rel (0) target = $region25
  $region24: #{wavelet_haar.1} parent=0 // pred_region
    _
  $region25: #{wavelet_haar.1} parent=0 // pred_fallthru
    _

</llo_original>
